<compile_context>
chip_gen: v7x
topology: tpu7x:2x2x1
jax: 0.10.0
libtpu: 0.0.40
codegen_flags: <defaults>
</compile_context>

<pallas_src>
import math
import jax
import jax.numpy as jnp
import numpy as np
from jax.experimental import pallas as pl
from jax.experimental.pallas import tpu as pltpu

# ----- model hyper-parameters (small, deterministic) -------------------------
B = 2
S_SEQ = 8
D_MODEL = 32
D_FF = 64
H = 4
D_K = D_MODEL // H
N_TOK = B * S_SEQ            # flattened (batch, seq) rows seen by the kernel
EPS = 1e-5
NEG_INF = -1.0e9


# ----- shared math helper (used both inside the kernel and by the JAX ref) ---
def _layernorm(x, alpha, bias):
    """Matches the custom torch LayerNorm: scalar alpha/bias, *unbiased* std,
    normalize by (std + eps)."""
    d = x.shape[-1]
    mean = jnp.mean(x, axis=-1, keepdims=True)
    var = jnp.sum((x - mean) ** 2, axis=-1, keepdims=True) / (d - 1)
    std = jnp.sqrt(var)
    return alpha * (x - mean) / (std + EPS) + bias


# ----- the Pallas kernel: the whole batch in one invocation -------------------
def encoder_block_kernel(
    ln_ref,                                   # SMEM (4,): [a0, b0, a1, b1]
    x_ref,                                    # (N_TOK, D_MODEL)
    mask_ref,                                 # (H*N_TOK, H*N_TOK) additive
    wqkv_ref, bqkv_ref,                       # fused qkv projection (D, 3D)
    wo_ref, bo_ref,                           # out projection (D, D)
    w1_ref, b1_ref, w2_ref, b2_ref,           # feed forward
    out_ref,                                  # (N_TOK, D_MODEL)
):
    x = x_ref[...]               # (16, 32)
    add_mask = mask_ref[...]     # (64, 64), block-diagonal additive {0,-1e9}

    # ---- residual connection 0: multi-head self attention (dropout = id) ----
    xn = _layernorm(x, ln_ref[0], ln_ref[1])
    # single fused projection: (N, D) @ (D, 3D) -> (N, 3D)
    qkv = jnp.dot(xn, wqkv_ref[...],
                  preferred_element_type=jnp.float32) + bqkv_ref[...]

    # Stack heads onto the sublane axis: (N, H*D_K) -> (H*N, D_K).
    # Static lane slices + sublane concatenation (no reshape across tiles).
    def stack_heads(base):
        return jnp.concatenate(
            [qkv[:, base + h * D_K: base + (h + 1) * D_K] for h in range(H)],
            axis=0)

    q_all = stack_heads(0)                 # (H*N, D_K) = (64, 8)
    k_all = stack_heads(D_MODEL)
    v_all = stack_heads(2 * D_MODEL)

    scale = 1.0 / math.sqrt(D_K)
    # One score matmul for all heads & batches; block-diagonal mask keeps the
    # softmax intra-(head, batch) (off-block entries get -1e9 -> exp == 0).
    s = jnp.dot(q_all, k_all.T, preferred_element_type=jnp.float32) * scale
    s = s + add_mask
    s = s - jnp.max(s, axis=-1, keepdims=True)
    p = jnp.exp(s)
    inv = pl.reciprocal(jnp.sum(p, axis=-1, keepdims=True), approx=False)
    p = p * inv
    ctx_all = jnp.dot(p, v_all, preferred_element_type=jnp.float32)  # (64, 8)

    # Un-stack heads back onto the lane axis: (H*N, D_K) -> (N, H*D_K).
    ctx = jnp.concatenate(
        [ctx_all[h * N_TOK:(h + 1) * N_TOK, :] for h in range(H)], axis=1)

    # single output projection for all heads
    attn = jnp.dot(ctx, wo_ref[...],
                   preferred_element_type=jnp.float32) + bo_ref[...]
    x = x + attn

    # ---- residual connection 1: feed forward ----
    xn = _layernorm(x, ln_ref[2], ln_ref[3])
    hidden = jnp.maximum(
        jnp.dot(xn, w1_ref[...], preferred_element_type=jnp.float32)
        + b1_ref[...], 0.0)
    ff = jnp.dot(hidden, w2_ref[...],
                 preferred_element_type=jnp.float32) + b2_ref[...]
    out_ref[...] = x + ff
    # TODO(synk): dropout is a no-op here (p=0 / eval); train-mode dropout
    # would use pltpu.prng_seed / pltpu.prng_random_bits.


def encoder_block(x, src_mask, ln_params, fused_params):
    """x: (B, S, D), src_mask: (S, S) float {0,1}, ln_params: (4,) f32."""
    batch, seq, d = x.shape
    wqkv, bqkv, wo, bo, w1, b1, w2, b2 = fused_params

    # Flatten the batch: one grid step for everything.
    x_flat = x.reshape(batch * seq, d)

    # Wrapper-side mask plumbing: additive (0/-1e9) src mask tiled into the
    # stacked (head, batch, seq) layout, with -1e9 on all off-diagonal
    # (cross-head / cross-batch) blocks.
    add_block = jnp.where(src_mask == 0.0, NEG_INF, 0.0).astype(jnp.float32)
    group = jnp.repeat(jnp.arange(H * batch), seq)          # stacked group id
    same_group = group[:, None] == group[None, :]
    add_mask = jnp.where(same_group,
                         jnp.tile(add_block, (H * batch, H * batch)),
                         NEG_INF).astype(jnp.float32)       # (H*B*S, H*B*S)

    in_specs = (
        [pl.BlockSpec(memory_space=pltpu.MemorySpace.SMEM)]   # ln scalars
        + [pl.BlockSpec(memory_space=pltpu.MemorySpace.VMEM)
           for _ in range(10)]                                # x, mask, weights
    )
    out_spec = pl.BlockSpec(memory_space=pltpu.MemorySpace.VMEM)

    out_flat = pl.pallas_call(
        encoder_block_kernel,
        out_shape=jax.ShapeDtypeStruct((batch * seq, d), jnp.float32),
        in_specs=in_specs,
        out_specs=out_spec,
    )(ln_params, x_flat, add_mask, wqkv, bqkv, wo, bo, w1, b1, w2, b2)
    return out_flat.reshape(batch, seq, d)


# ----- pure-JAX reference (unfused weights, same math as the torch module) ---
def encoder_block_ref(x, src_mask, ln, params):
    wq, bq, wk, bk, wv, bv, wo, bo, w1, b1, w2, b2 = params

    def mha_ref(xn, mask):
        q = xn @ wq + bq
        k = xn @ wk + bk
        v = xn @ wv + bv

        def split(t):
            return t.reshape(t.shape[0], H, D_K).transpose(1, 0, 2)

        qh, kh, vh = split(q), split(k), split(v)
        s = jnp.einsum('hqd,hkd->hqk', qh, kh) / math.sqrt(D_K)
        s = jnp.where(mask[None] == 0.0, NEG_INF, s)
        p = jax.nn.softmax(s, axis=-1)
        ctx = jnp.einsum('hqk,hkd->hqd', p, vh)
        ctx = ctx.transpose(1, 0, 2).reshape(xn.shape[0], D_MODEL)
        return ctx @ wo + bo

    def single(xb):
        xn = _layernorm(xb, ln[0], ln[1])
        h1 = xb + mha_ref(xn, src_mask)
        xn2 = _layernorm(h1, ln[2], ln[3])
        ff = jnp.maximum(xn2 @ w1 + b1, 0.0) @ w2 + b2
        return h1 + ff

    return jax.vmap(single)(x)


# ----- deterministic parameter init (torch nn.Linear-style uniform) ----------
def init_linear(key, fan_in, fan_out):
    k1, k2 = jax.random.split(key)
    bound = 1.0 / math.sqrt(fan_in)
    w = jax.random.uniform(k1, (fan_in, fan_out), jnp.float32, -bound, bound)
    b = jax.random.uniform(k2, (1, fan_out), jnp.float32, -bound, bound)
    return w, b


if __name__ == "__main__":
    root = jax.random.PRNGKey(0)
    keys = jax.random.split(root, 8)

    # self-attention w_q, w_k, w_v, w_o and feed-forward linear1 / linear2
    wq, bq = init_linear(keys[0], D_MODEL, D_MODEL)
    wk, bk = init_linear(keys[1], D_MODEL, D_MODEL)
    wv, bv = init_linear(keys[2], D_MODEL, D_MODEL)
    wo, bo = init_linear(keys[3], D_MODEL, D_MODEL)
    w1, b1 = init_linear(keys[4], D_MODEL, D_FF)
    w2, b2 = init_linear(keys[5], D_FF, D_MODEL)

    # LayerNorm params: alpha=1, bias=0 (torch init), flat [a0, b0, a1, b1]
    ln_params = jnp.array([1.0, 0.0, 1.0, 0.0], dtype=jnp.float32)

    # inputs: encoder source mask = padding mask (last 2 key positions masked)
    x = jax.random.normal(keys[6], (B, S_SEQ, D_MODEL), jnp.float32)
    src_mask = jnp.concatenate(
        [jnp.ones((S_SEQ, S_SEQ - 2), jnp.float32),
         jnp.zeros((S_SEQ, 2), jnp.float32)], axis=1)

    # wrapper-side layout plumbing: fuse qkv into one (D, 3D) projection
    wqkv = jnp.concatenate([wq, wk, wv], axis=1)       # (D, 3D)
    bqkv = jnp.concatenate([bq, bk, bv], axis=1)       # (1, 3D)

    out = encoder_block(x, src_mask, ln_params,
                        (wqkv, bqkv, wo, bo, w1, b1, w2, b2))
    out = jax.block_until_ready(out)

    ref = encoder_block_ref(x, src_mask, ln_params,
                            (wq, bq, wk, bk, wv, bv, wo, bo, w1, b1, w2, b2))
    np.testing.assert_allclose(np.asarray(out), np.asarray(ref),
                               rtol=1e-4, atol=1e-3)
    print("KERNEL_OK")
</pallas_src>

<mosaic_0001>
module attributes {stable_mosaic.version = 11 : i64} {
  func.func @encoder_block_kernel(%arg0: memref<4xf32, #tpu.memory_space<smem>>, %arg1: memref<16x32xf32, #tpu.memory_space<vmem>>, %arg2: memref<64x64xf32, #tpu.memory_space<vmem>>, %arg3: memref<32x96xf32, #tpu.memory_space<vmem>>, %arg4: memref<1x96xf32, #tpu.memory_space<vmem>>, %arg5: memref<32x32xf32, #tpu.memory_space<vmem>>, %arg6: memref<1x32xf32, #tpu.memory_space<vmem>>, %arg7: memref<32x64xf32, #tpu.memory_space<vmem>>, %arg8: memref<1x64xf32, #tpu.memory_space<vmem>>, %arg9: memref<64x32xf32, #tpu.memory_space<vmem>>, %arg10: memref<1x32xf32, #tpu.memory_space<vmem>>, %arg11: memref<16x32xf32, #tpu.memory_space<vmem>>) attributes {dimension_semantics = [], scalar_prefetch = 0 : i64, scratch_operands = 0 : i64, tpu.core_type = #tpu.core_type<tc>} {
    %c0 = arith.constant 0 : index
    %c0_0 = arith.constant 0 : index
    %0 = vector.load %arg1[%c0, %c0_0] : memref<16x32xf32, #tpu.memory_space<vmem>>, vector<16x32xf32>
    %c0_1 = arith.constant 0 : index
    %c0_2 = arith.constant 0 : index
    %1 = vector.load %arg2[%c0_1, %c0_2] : memref<64x64xf32, #tpu.memory_space<vmem>>, vector<64x64xf32>
    %c0_3 = arith.constant 0 : index
    %2 = memref.load %arg0[%c0_3] : memref<4xf32, #tpu.memory_space<smem>>
    %c1 = arith.constant 1 : index
    %3 = memref.load %arg0[%c1] : memref<4xf32, #tpu.memory_space<smem>>
    %cst = arith.constant dense<0.000000e+00> : vector<16xf32>
    %4 = vector.multi_reduction <add>, %0, %cst [1] : vector<16x32xf32> to vector<16xf32>
    %5 = vector.shape_cast %4 : vector<16xf32> to vector<16x1xf32>
    %cst_4 = arith.constant 3.200000e+01 : f32
    %6 = vector.broadcast %cst_4 : f32 to vector<16x1xf32>
    %7 = arith.divf %5, %6 : vector<16x1xf32>
    %8 = vector.broadcast %7 : vector<16x1xf32> to vector<16x32xf32>
    %9 = arith.subf %0, %8 : vector<16x32xf32>
    %10 = arith.mulf %9, %9 : vector<16x32xf32>
    %cst_5 = arith.constant dense<0.000000e+00> : vector<16xf32>
    %11 = vector.multi_reduction <add>, %10, %cst_5 [1] : vector<16x32xf32> to vector<16xf32>
    %12 = vector.shape_cast %11 : vector<16xf32> to vector<16x1xf32>
    %cst_6 = arith.constant 3.100000e+01 : f32
    %13 = vector.broadcast %cst_6 : f32 to vector<16x1xf32>
    %14 = arith.divf %12, %13 : vector<16x1xf32>
    %15 = math.sqrt %14 : vector<16x1xf32>
    %16 = vector.broadcast %7 : vector<16x1xf32> to vector<16x32xf32>
    %17 = arith.subf %0, %16 : vector<16x32xf32>
    %18 = vector.broadcast %2 : f32 to vector<16x32xf32>
    %19 = arith.mulf %18, %17 : vector<16x32xf32>
    %cst_7 = arith.constant 9.99999974E-6 : f32
    %20 = vector.broadcast %cst_7 : f32 to vector<16x1xf32>
    %21 = arith.addf %15, %20 : vector<16x1xf32>
    %22 = vector.broadcast %21 : vector<16x1xf32> to vector<16x32xf32>
    %23 = arith.divf %19, %22 : vector<16x32xf32>
    %24 = vector.broadcast %3 : f32 to vector<16x32xf32>
    %25 = arith.addf %23, %24 : vector<16x32xf32>
    %c0_8 = arith.constant 0 : index
    %c0_9 = arith.constant 0 : index
    %26 = vector.load %arg3[%c0_8, %c0_9] : memref<32x96xf32, #tpu.memory_space<vmem>>, vector<32x96xf32>
    %cst_10 = arith.constant dense<0.000000e+00> : vector<16x96xf32>
    %27 = tpu.matmul %25, %26, %cst_10 {dimension_numbers = #tpu.dot_dimension_numbers<[1], [0], [0], [1], [0, 0, 1, 1], [], []>} : vector<16x32xf32>, vector<32x96xf32>, vector<16x96xf32> -> vector<16x96xf32>
    %c0_11 = arith.constant 0 : index
    %c0_12 = arith.constant 0 : index
    %28 = vector.load %arg4[%c0_11, %c0_12] : memref<1x96xf32, #tpu.memory_space<vmem>>, vector<1x96xf32>
    %29 = vector.broadcast %28 : vector<1x96xf32> to vector<16x96xf32>
    %30 = arith.addf %27, %29 : vector<16x96xf32>
    %31 = vector.extract_strided_slice %30 {offsets = [0, 0], sizes = [16, 8], strides = [1, 1]} : vector<16x96xf32> to vector<16x8xf32>
    %32 = vector.extract_strided_slice %30 {offsets = [0, 8], sizes = [16, 8], strides = [1, 1]} : vector<16x96xf32> to vector<16x8xf32>
    %33 = vector.extract_strided_slice %30 {offsets = [0, 16], sizes = [16, 8], strides = [1, 1]} : vector<16x96xf32> to vector<16x8xf32>
    %34 = vector.extract_strided_slice %30 {offsets = [0, 24], sizes = [16, 8], strides = [1, 1]} : vector<16x96xf32> to vector<16x8xf32>
    %35 = tpu.concatenate %31, %32, %33, %34 in 0 : vector<16x8xf32>, vector<16x8xf32>, vector<16x8xf32>, vector<16x8xf32> -> vector<64x8xf32>
    %36 = vector.extract_strided_slice %30 {offsets = [0, 32], sizes = [16, 8], strides = [1, 1]} : vector<16x96xf32> to vector<16x8xf32>
    %37 = vector.extract_strided_slice %30 {offsets = [0, 40], sizes = [16, 8], strides = [1, 1]} : vector<16x96xf32> to vector<16x8xf32>
    %38 = vector.extract_strided_slice %30 {offsets = [0, 48], sizes = [16, 8], strides = [1, 1]} : vector<16x96xf32> to vector<16x8xf32>
    %39 = vector.extract_strided_slice %30 {offsets = [0, 56], sizes = [16, 8], strides = [1, 1]} : vector<16x96xf32> to vector<16x8xf32>
    %40 = tpu.concatenate %36, %37, %38, %39 in 0 : vector<16x8xf32>, vector<16x8xf32>, vector<16x8xf32>, vector<16x8xf32> -> vector<64x8xf32>
    %41 = vector.extract_strided_slice %30 {offsets = [0, 64], sizes = [16, 8], strides = [1, 1]} : vector<16x96xf32> to vector<16x8xf32>
    %42 = vector.extract_strided_slice %30 {offsets = [0, 72], sizes = [16, 8], strides = [1, 1]} : vector<16x96xf32> to vector<16x8xf32>
    %43 = vector.extract_strided_slice %30 {offsets = [0, 80], sizes = [16, 8], strides = [1, 1]} : vector<16x96xf32> to vector<16x8xf32>
    %44 = vector.extract_strided_slice %30 {offsets = [0, 88], sizes = [16, 8], strides = [1, 1]} : vector<16x96xf32> to vector<16x8xf32>
    %45 = tpu.concatenate %41, %42, %43, %44 in 0 : vector<16x8xf32>, vector<16x8xf32>, vector<16x8xf32>, vector<16x8xf32> -> vector<64x8xf32>
    %46 = tpu.transpose %40, [1, 0] : vector<64x8xf32> -> vector<8x64xf32>
    %cst_13 = arith.constant dense<0.000000e+00> : vector<64x64xf32>
    %47 = tpu.matmul %35, %46, %cst_13 {dimension_numbers = #tpu.dot_dimension_numbers<[1], [0], [0], [1], [0, 0, 1, 1], [], []>} : vector<64x8xf32>, vector<8x64xf32>, vector<64x64xf32> -> vector<64x64xf32>
    %cst_14 = arith.constant 0.353553385 : f32
    %48 = vector.broadcast %cst_14 : f32 to vector<64x64xf32>
    %49 = arith.mulf %47, %48 : vector<64x64xf32>
    %50 = arith.addf %49, %1 : vector<64x64xf32>
    %cst_15 = arith.constant dense<0xFF800000> : vector<64xf32>
    %51 = vector.multi_reduction <maximumf>, %50, %cst_15 [1] : vector<64x64xf32> to vector<64xf32>
    %52 = vector.shape_cast %51 : vector<64xf32> to vector<64x1xf32>
    %53 = vector.broadcast %52 : vector<64x1xf32> to vector<64x64xf32>
    %54 = arith.subf %50, %53 : vector<64x64xf32>
    %55 = math.exp %54 : vector<64x64xf32>
    %cst_16 = arith.constant dense<0.000000e+00> : vector<64xf32>
    %56 = vector.multi_reduction <add>, %55, %cst_16 [1] : vector<64x64xf32> to vector<64xf32>
    %57 = vector.shape_cast %56 : vector<64xf32> to vector<64x1xf32>
    %58 = tpu.reciprocal %57 : vector<64x1xf32> -> vector<64x1xf32>
    %59 = vector.broadcast %58 : vector<64x1xf32> to vector<64x64xf32>
    %60 = arith.mulf %55, %59 : vector<64x64xf32>
    %cst_17 = arith.constant dense<0.000000e+00> : vector<64x8xf32>
    %61 = tpu.matmul %60, %45, %cst_17 {dimension_numbers = #tpu.dot_dimension_numbers<[1], [0], [0], [1], [0, 0, 1, 1], [], []>} : vector<64x64xf32>, vector<64x8xf32>, vector<64x8xf32> -> vector<64x8xf32>
    %62 = vector.extract_strided_slice %61 {offsets = [0, 0], sizes = [16, 8], strides = [1, 1]} : vector<64x8xf32> to vector<16x8xf32>
    %63 = vector.extract_strided_slice %61 {offsets = [16, 0], sizes = [16, 8], strides = [1, 1]} : vector<64x8xf32> to vector<16x8xf32>
    %64 = vector.extract_strided_slice %61 {offsets = [32, 0], sizes = [16, 8], strides = [1, 1]} : vector<64x8xf32> to vector<16x8xf32>
    %65 = vector.extract_strided_slice %61 {offsets = [48, 0], sizes = [16, 8], strides = [1, 1]} : vector<64x8xf32> to vector<16x8xf32>
    %66 = tpu.concatenate %62, %63, %64, %65 in 1 : vector<16x8xf32>, vector<16x8xf32>, vector<16x8xf32>, vector<16x8xf32> -> vector<16x32xf32>
    %c0_18 = arith.constant 0 : index
    %c0_19 = arith.constant 0 : index
    %67 = vector.load %arg5[%c0_18, %c0_19] : memref<32x32xf32, #tpu.memory_space<vmem>>, vector<32x32xf32>
    %cst_20 = arith.constant dense<0.000000e+00> : vector<16x32xf32>
    %68 = tpu.matmul %66, %67, %cst_20 {dimension_numbers = #tpu.dot_dimension_numbers<[1], [0], [0], [1], [0, 0, 1, 1], [], []>} : vector<16x32xf32>, vector<32x32xf32>, vector<16x32xf32> -> vector<16x32xf32>
    %c0_21 = arith.constant 0 : index
    %c0_22 = arith.constant 0 : index
    %69 = vector.load %arg6[%c0_21, %c0_22] : memref<1x32xf32, #tpu.memory_space<vmem>>, vector<1x32xf32>
    %70 = vector.broadcast %69 : vector<1x32xf32> to vector<16x32xf32>
    %71 = arith.addf %68, %70 : vector<16x32xf32>
    %72 = arith.addf %0, %71 : vector<16x32xf32>
    %c2 = arith.constant 2 : index
    %73 = memref.load %arg0[%c2] : memref<4xf32, #tpu.memory_space<smem>>
    %c3 = arith.constant 3 : index
    %74 = memref.load %arg0[%c3] : memref<4xf32, #tpu.memory_space<smem>>
    %cst_23 = arith.constant dense<0.000000e+00> : vector<16xf32>
    %75 = vector.multi_reduction <add>, %72, %cst_23 [1] : vector<16x32xf32> to vector<16xf32>
    %76 = vector.shape_cast %75 : vector<16xf32> to vector<16x1xf32>
    %cst_24 = arith.constant 3.200000e+01 : f32
    %77 = vector.broadcast %cst_24 : f32 to vector<16x1xf32>
    %78 = arith.divf %76, %77 : vector<16x1xf32>
    %79 = vector.broadcast %78 : vector<16x1xf32> to vector<16x32xf32>
    %80 = arith.subf %72, %79 : vector<16x32xf32>
    %81 = arith.mulf %80, %80 : vector<16x32xf32>
    %cst_25 = arith.constant dense<0.000000e+00> : vector<16xf32>
    %82 = vector.multi_reduction <add>, %81, %cst_25 [1] : vector<16x32xf32> to vector<16xf32>
    %83 = vector.shape_cast %82 : vector<16xf32> to vector<16x1xf32>
    %cst_26 = arith.constant 3.100000e+01 : f32
    %84 = vector.broadcast %cst_26 : f32 to vector<16x1xf32>
    %85 = arith.divf %83, %84 : vector<16x1xf32>
    %86 = math.sqrt %85 : vector<16x1xf32>
    %87 = vector.broadcast %78 : vector<16x1xf32> to vector<16x32xf32>
    %88 = arith.subf %72, %87 : vector<16x32xf32>
    %89 = vector.broadcast %73 : f32 to vector<16x32xf32>
    %90 = arith.mulf %89, %88 : vector<16x32xf32>
    %cst_27 = arith.constant 9.99999974E-6 : f32
    %91 = vector.broadcast %cst_27 : f32 to vector<16x1xf32>
    %92 = arith.addf %86, %91 : vector<16x1xf32>
    %93 = vector.broadcast %92 : vector<16x1xf32> to vector<16x32xf32>
    %94 = arith.divf %90, %93 : vector<16x32xf32>
    %95 = vector.broadcast %74 : f32 to vector<16x32xf32>
    %96 = arith.addf %94, %95 : vector<16x32xf32>
    %c0_28 = arith.constant 0 : index
    %c0_29 = arith.constant 0 : index
    %97 = vector.load %arg7[%c0_28, %c0_29] : memref<32x64xf32, #tpu.memory_space<vmem>>, vector<32x64xf32>
    %cst_30 = arith.constant dense<0.000000e+00> : vector<16x64xf32>
    %98 = tpu.matmul %96, %97, %cst_30 {dimension_numbers = #tpu.dot_dimension_numbers<[1], [0], [0], [1], [0, 0, 1, 1], [], []>} : vector<16x32xf32>, vector<32x64xf32>, vector<16x64xf32> -> vector<16x64xf32>
    %c0_31 = arith.constant 0 : index
    %c0_32 = arith.constant 0 : index
    %99 = vector.load %arg8[%c0_31, %c0_32] : memref<1x64xf32, #tpu.memory_space<vmem>>, vector<1x64xf32>
    %100 = vector.broadcast %99 : vector<1x64xf32> to vector<16x64xf32>
    %101 = arith.addf %98, %100 : vector<16x64xf32>
    %cst_33 = arith.constant 0.000000e+00 : f32
    %102 = vector.broadcast %cst_33 : f32 to vector<16x64xf32>
    %103 = arith.maximumf %101, %102 : vector<16x64xf32>
    %c0_34 = arith.constant 0 : index
    %c0_35 = arith.constant 0 : index
    %104 = vector.load %arg9[%c0_34, %c0_35] : memref<64x32xf32, #tpu.memory_space<vmem>>, vector<64x32xf32>
    %cst_36 = arith.constant dense<0.000000e+00> : vector<16x32xf32>
    %105 = tpu.matmul %103, %104, %cst_36 {dimension_numbers = #tpu.dot_dimension_numbers<[1], [0], [0], [1], [0, 0, 1, 1], [], []>} : vector<16x64xf32>, vector<64x32xf32>, vector<16x32xf32> -> vector<16x32xf32>
    %c0_37 = arith.constant 0 : index
    %c0_38 = arith.constant 0 : index
    %106 = vector.load %arg10[%c0_37, %c0_38] : memref<1x32xf32, #tpu.memory_space<vmem>>, vector<1x32xf32>
    %107 = vector.broadcast %106 : vector<1x32xf32> to vector<16x32xf32>
    %108 = arith.addf %105, %107 : vector<16x32xf32>
    %109 = arith.addf %72, %108 : vector<16x32xf32>
    %c0_39 = arith.constant 0 : index
    %c0_40 = arith.constant 0 : index
    %110 = vector.load %arg11[%c0_39, %c0_40] : memref<16x32xf32, #tpu.memory_space<vmem>>, vector<16x32xf32>
    tpu.vector_store %arg11[%c0_39, %c0_40], %109 {strides = array<i32>} : memref<16x32xf32, #tpu.memory_space<vmem>>, vector<16x32xf32>,
    return
  }
}

</mosaic_0001>

<llo_original>
// kernel: tpu_custom_call.1
$region0: #{tpu_custom_call.1}
  #allocation0 [shape = 'u32[]', space=smem, size = 0x4, offset = 0x4, fixed_abs, tag = 'smem constant byte address 0x4 - core index']
  #allocation1 [shape = 'u32[144,128]{1,0:T(1,128)}', space=vmem, size = 0x12000, scoped, tag = 'internal scratch']
  %s0 = inlined_call_operand.vmem [shape: f32[4], index: 0, kind: input, shape index: {}]
  %s1 = inlined_call_operand.hbm [shape: f32[16,32], index: 1, kind: input, shape index: {}]
  %s2 = inlined_call_operand.vmem [shape: f32[64,64], index: 2, kind: input, shape index: {}]
  %s3 = inlined_call_operand.vmem [shape: f32[32,96], index: 3, kind: input, shape index: {}]
  %s4 = inlined_call_operand.vmem [shape: f32[1,96], index: 4, kind: input, shape index: {}]
  %s5 = inlined_call_operand.hbm [shape: f32[32,32], index: 5, kind: input, shape index: {}]
  %s6 = inlined_call_operand.hbm [shape: f32[1,32], index: 6, kind: input, shape index: {}]
  %s7 = inlined_call_operand.hbm [shape: f32[32,64], index: 7, kind: input, shape index: {}]
  %s8 = inlined_call_operand.hbm [shape: f32[1,64], index: 8, kind: input, shape index: {}]
  %s9 = inlined_call_operand.vmem [shape: f32[64,32], index: 9, kind: input, shape index: {}]
  %s10 = inlined_call_operand.vmem [shape: f32[1,32], index: 10, kind: input, shape index: {}]
  %s11 = inlined_call_operand.hbm [shape: f32[16,32], index: 11, kind: output, shape index: {}]
  %s12 = sld [smem:[#allocation0]]
  $region78: #{tpu_custom_call.1} parent=0
    _
  %s14 = ssub.s32 1, %s12
  %s15 = scalar_select 0, %s14, %s12
  $region1: #{tpu_custom_call.1} parent=0
    #allocation2 [shape = 'u8[512]{0}', space=smem, size = 0x200, scoped, tag = 'input window, operand 0, single buffered']
    #allocation3 [shape = 's32[1]{0}', space=sflag, size = 0x4, scoped, tag = 'scoped memory for tpu_custom_call.1']
    #allocation4 [shape = 's32[1]{0}', space=sflag, size = 0x4, scoped, tag = 'scoped memory for tpu_custom_call.1']
    #allocation5 [shape = 's32[1]{0}', space=sflag, size = 0x4, scoped, tag = 'scoped memory for tpu_custom_call.1']
    #allocation6 [shape = 'u8[8192]{0}', space=vmem, size = 0x2000, scoped, tag = 'input window, operand 1, single buffered']
    #allocation7 [shape = 'u8[16384]{0}', space=vmem, size = 0x4000, scoped, tag = 'input window, operand 5, single buffered']
    #allocation8 [shape = 's32[1]{0}', space=sflag, size = 0x4, scoped, tag = 'scoped memory for tpu_custom_call.1']
    #allocation9 [shape = 'u8[512]{0}', space=vmem, size = 0x400, scoped, tag = 'input window, operand 6, single buffered']
    #allocation10 [shape = 'u8[16384]{0}', space=vmem, size = 0x4000, scoped, tag = 'input window, operand 7, single buffered']
    #allocation11 [shape = 's32[1]{0}', space=sflag, size = 0x4, scoped, tag = 'scoped memory for tpu_custom_call.1']
    #allocation12 [shape = 'u8[512]{0}', space=vmem, size = 0x400, scoped, tag = 'input window, operand 8, single buffered']
    #allocation13 [shape = 'u8[8192]{0}', space=vmem, size = 0x2000, scoped, tag = 'output window, operand 0, single buffered']
    %16 = vsyncpa [#allocation5], 0
    %17 = vsyncpa [#allocation3], 0
    %18 = vsyncpa [#allocation8], 0
    %19 = vsyncpa [#allocation11], 0
    %20 = vsyncpa [#allocation4], 0
    // Predicated region
    $region2: #{tpu_custom_call.1} parent=1 // pred_check
      _
    $region3: #{tpu_custom_call.1} parent=1 // pred_check_branch
      %22 = sbr.rel (0) target = $region5
    $region4: #{tpu_custom_call.1} parent=1 // pred_region
      %s24 = ssub.s32 16, 16
      %25 = vsyncadd [#allocation5], %s24
      %s27 = sshll.u32 %s0, 4
      %s28 = int_to_ptr.vmem [resolvable:$true] %s27
      %30 = dma.vmem_to_smem %s28, 16, [#allocation2], [#allocation5]
    $region5: #{tpu_custom_call.1} parent=1 // pred_fallthru
      _
    // Predicated region
    $region6: #{tpu_custom_call.1} parent=1 // pred_check
      _
    $region7: #{tpu_custom_call.1} parent=1 // pred_check_branch
      %32 = sbr.rel (0) target = $region9
    $region8: #{tpu_custom_call.1} parent=1 // pred_region
      %s34 = ssub.s32 256, 256
      %35 = vsyncadd [#allocation3], %s34
      %s36 = sshll.u32 [#allocation6], 4
      %s37 = int_to_ptr.vmem [resolvable:$true] %s36
      %42 = dma.hbm_to_vmem [thread:$0]  %s1, 256, %s37, [#allocation3], 128, 128, 8
    $region9: #{tpu_custom_call.1} parent=1 // pred_fallthru
      _
    // Predicated region
    $region10: #{tpu_custom_call.1} parent=1 // pred_check
      _
    $region11: #{tpu_custom_call.1} parent=1 // pred_check_branch
      %44 = sbr.rel (0) target = $region13
    $region12: #{tpu_custom_call.1} parent=1 // pred_region
      _
    $region13: #{tpu_custom_call.1} parent=1 // pred_fallthru
      _
    // Predicated region
    $region14: #{tpu_custom_call.1} parent=1 // pred_check
      _
    $region15: #{tpu_custom_call.1} parent=1 // pred_check_branch
      %46 = sbr.rel (0) target = $region17
    $region16: #{tpu_custom_call.1} parent=1 // pred_region
      _
    $region17: #{tpu_custom_call.1} parent=1 // pred_fallthru
      _
    // Predicated region
    $region18: #{tpu_custom_call.1} parent=1 // pred_check
      _
    $region19: #{tpu_custom_call.1} parent=1 // pred_check_branch
      %48 = sbr.rel (0) target = $region21
    $region20: #{tpu_custom_call.1} parent=1 // pred_region
      _
    $region21: #{tpu_custom_call.1} parent=1 // pred_fallthru
      _
    // Predicated region
    $region22: #{tpu_custom_call.1} parent=1 // pred_check
      _
    $region23: #{tpu_custom_call.1} parent=1 // pred_check_branch
      %50 = sbr.rel (0) target = $region25
    $region24: #{tpu_custom_call.1} parent=1 // pred_region
      %s52 = ssub.s32 512, 512
      %53 = vsyncadd [#allocation8], %s52
      %s54 = sshll.u32 [#allocation7], 4
      %s55 = int_to_ptr.vmem [resolvable:$true] %s54
      %60 = dma.hbm_to_vmem [thread:$0]  %s5, 512, %s55, [#allocation8], 128, 128, 8
    $region25: #{tpu_custom_call.1} parent=1 // pred_fallthru
      _
    // Predicated region
    $region26: #{tpu_custom_call.1} parent=1 // pred_check
      _
    $region27: #{tpu_custom_call.1} parent=1 // pred_check_branch
      %62 = sbr.rel (0) target = $region29
    $region28: #{tpu_custom_call.1} parent=1 // pred_region
      %s64 = ssub.s32 16, 16
      %65 = vsyncadd [#allocation8], %s64
      %s67 = sshll.u32 [#allocation9], 4
      %s68 = int_to_ptr.vmem [resolvable:$true] %s67
      %70 = dma.hbm_to_vmem [thread:$0]  %s6, 16, %s68, [#allocation8]
    $region29: #{tpu_custom_call.1} parent=1 // pred_fallthru
      _
    // Predicated region
    $region30: #{tpu_custom_call.1} parent=1 // pred_check
      _
    $region31: #{tpu_custom_call.1} parent=1 // pred_check_branch
      %72 = sbr.rel (0) target = $region33
    $region32: #{tpu_custom_call.1} parent=1 // pred_region
      %s74 = ssub.s32 512, 512
      %75 = vsyncadd [#allocation11], %s74
      %s76 = sshll.u32 [#allocation10], 4
      %s77 = int_to_ptr.vmem [resolvable:$true] %s76
      %82 = dma.hbm_to_vmem [thread:$0]  %s7, 512, %s77, [#allocation11], 128, 128, 8
    $region33: #{tpu_custom_call.1} parent=1 // pred_fallthru
      _
    // Predicated region
    $region34: #{tpu_custom_call.1} parent=1 // pred_check
      _
    $region35: #{tpu_custom_call.1} parent=1 // pred_check_branch
      %84 = sbr.rel (0) target = $region37
    $region36: #{tpu_custom_call.1} parent=1 // pred_region
      %s86 = ssub.s32 16, 16
      %87 = vsyncadd [#allocation11], %s86
      %s89 = sshll.u32 [#allocation12], 4
      %s90 = int_to_ptr.vmem [resolvable:$true] %s89
      %92 = dma.hbm_to_vmem [thread:$0]  %s8, 16, %s90, [#allocation11]
    $region37: #{tpu_custom_call.1} parent=1 // pred_fallthru
      _
    // Predicated region
    $region38: #{tpu_custom_call.1} parent=1 // pred_check
      _
    $region39: #{tpu_custom_call.1} parent=1 // pred_check_branch
      %94 = sbr.rel (0) target = $region41
    $region40: #{tpu_custom_call.1} parent=1 // pred_region
      _
    $region41: #{tpu_custom_call.1} parent=1 // pred_fallthru
      _
    // Predicated region
    $region42: #{tpu_custom_call.1} parent=1 // pred_check
      _
    $region43: #{tpu_custom_call.1} parent=1 // pred_check_branch
      %96 = sbr.rel (0) target = $region45
    $region44: #{tpu_custom_call.1} parent=1 // pred_region
      _
    $region45: #{tpu_custom_call.1} parent=1 // pred_fallthru
      _
    // Predicated region
    $region46: #{tpu_custom_call.1} parent=1 // pred_check
      _
    $region47: #{tpu_custom_call.1} parent=1 // pred_check_branch
      %98 = sbr.rel (0) target = $region49
    $region48: #{tpu_custom_call.1} parent=1 // pred_region
      %99 = dma.done [#allocation5], 16
    $region49: #{tpu_custom_call.1} parent=1 // pred_fallthru
      _
    // Predicated region
    $region50: #{tpu_custom_call.1} parent=1 // pred_check
      _
    $region51: #{tpu_custom_call.1} parent=1 // pred_check_branch
      %101 = sbr.rel (0) target = $region53
    $region52: #{tpu_custom_call.1} parent=1 // pred_region
      %102 = dma.done [#allocation3], 256
    $region53: #{tpu_custom_call.1} parent=1 // pred_fallthru
      _
    // Predicated region
    $region54: #{tpu_custom_call.1} parent=1 // pred_check
      _
    $region55: #{tpu_custom_call.1} parent=1 // pred_check_branch
      %104 = sbr.rel (0) target = $region57
    $region56: #{tpu_custom_call.1} parent=1 // pred_region
      %105 = dma.done [#allocation8], 512
    $region57: #{tpu_custom_call.1} parent=1 // pred_fallthru
      _
    // Predicated region
    $region58: #{tpu_custom_call.1} parent=1 // pred_check
      _
    $region59: #{tpu_custom_call.1} parent=1 // pred_check_branch
      %107 = sbr.rel (0) target = $region61
    $region60: #{tpu_custom_call.1} parent=1 // pred_region
      %108 = dma.done [#allocation8], 16
    $region61: #{tpu_custom_call.1} parent=1 // pred_fallthru
      _
    // Predicated region
    $region62: #{tpu_custom_call.1} parent=1 // pred_check
      _
    $region63: #{tpu_custom_call.1} parent=1 // pred_check_branch
      %110 = sbr.rel (0) target = $region65
    $region64: #{tpu_custom_call.1} parent=1 // pred_region
      %111 = dma.done [#allocation11], 512
    $region65: #{tpu_custom_call.1} parent=1 // pred_fallthru
      _
    // Predicated region
    $region66: #{tpu_custom_call.1} parent=1 // pred_check
      _
    $region67: #{tpu_custom_call.1} parent=1 // pred_check_branch
      %113 = sbr.rel (0) target = $region69
    $region68: #{tpu_custom_call.1} parent=1 // pred_region
      %114 = dma.done [#allocation11], 16
    $region69: #{tpu_custom_call.1} parent=1 // pred_fallthru
      _
    %115 = sfence
    %v116 = vld [vmem:[#allocation6] sm:$0xff]
    %v117 = vld [vmem:[#allocation6 + $0x8] sm:$0xff]
    %v118 = vld [vmem:[%s2] sm:$0xff]
    %v119 = vld [vmem:[%s2 + $0x8] sm:$0xff]
    %v120 = vld [vmem:[%s2 + $0x10] sm:$0xff]
    %v121 = vld [vmem:[%s2 + $0x18] sm:$0xff]
    %v122 = vld [vmem:[%s2 + $0x20] sm:$0xff]
    %v123 = vld [vmem:[%s2 + $0x28] sm:$0xff]
    %v124 = vld [vmem:[%s2 + $0x30] sm:$0xff]
    %v125 = vld [vmem:[%s2 + $0x38] sm:$0xff]
    %s126 = sld [smem:[#allocation2]]
    %s127 = sld [smem:[#allocation2 + $0x1]]
    %vm128 = vcmask 261120
    %v129 = vsel %vm128, %v116, 0.0
    %130 = vadd.xlane.f32.xlu0 %v129
    %v131 = vpop.xlane.xlu0 %130
    %v132 = vsel %vm128, %v117, 0.0
    %133 = vadd.xlane.f32.xlu0 %v132
    %v134 = vpop.xlane.xlu0 %133
    %v135 = vrcp.pop 32.0
    %v136 = vmul.f32 %v131, %v135
    %v137 = vmul.f32 %v134, %v135
    %v138 = vsub.f32 %v116, %v136
    %v139 = vsub.f32 %v117, %v137
    %v140 = vmul.f32 %v138, %v138
    %v141 = vmul.f32 %v139, %v139
    %v142 = vsel %vm128, %v140, 0.0
    %143 = vadd.xlane.f32.xlu0 %v142
    %v144 = vpop.xlane.xlu0 %143
    %v145 = vsel %vm128, %v141, 0.0
    %146 = vadd.xlane.f32.xlu0 %v145
    %v147 = vpop.xlane.xlu0 %146
    %v148 = vrcp.pop 31.0
    %v149 = vmul.f32 %v144, %v148
    %v150 = vmul.f32 %v147, %v148
    %v151 = vrsqrt.pop %v149
    %v152 = vmul.f32 %v149, %v151
    %vm153 = vcmp.eq.f32.partialorder %v149, inf
    %v154 = vsel %vm153, %v149, %v152
    %vm155 = vcmp.eq.f32.partialorder %v149, 0.0
    %v156 = vand.u32 %v149, 2147483648
    %v157 = vsel %vm155, %v156, %v154
    %v158 = vrsqrt.pop %v150
    %v159 = vmul.f32 %v150, %v158
    %vm160 = vcmp.eq.f32.partialorder %v150, inf
    %v161 = vsel %vm160, %v150, %v159
    %vm162 = vcmp.eq.f32.partialorder %v150, 0.0
    %v163 = vand.u32 %v150, 2147483648
    %v164 = vsel %vm162, %v163, %v161
    %v165 = vstv %s126
    %v166 = vmul.f32 %v165, %v138
    %v167 = vmul.f32 %v165, %v139
    %v168 = vadd.f32 %v157, 1e-05
    %v169 = vadd.f32 %v164, 1e-05
    %v170 = vrcp.pop %v168
    %v171 = vmul.f32 %v166, %v170
    %v172 = vrcp.pop %v169
    %v173 = vmul.f32 %v167, %v172
    %v174 = vstv %s127
    %v175 = vadd.f32 %v171, %v174
    %v176 = vadd.f32 %v173, %v174
    %v177 = vld [vmem:[%s3] sm:$0xff]
    %v178 = vld [vmem:[%s3 + $0x8] sm:$0xff]
    %v179 = vld [vmem:[%s3 + $0x10] sm:$0xff]
    %v180 = vld [vmem:[%s3 + $0x18] sm:$0xff]
    %v181 = vld [vmem:[%s4] sm:$0x1]
    %v183 = vlaneseq
    %v184 = vshrl.u32 %v183, 7
    %v185 = vsub.s32 0, %v184
    %v186 = vrot.slane %v181, %v185
    %v189 = vsel %vm128, %v175, 0
    %v192 = vsel %vm128, %v176, 0
    %194 = vmatprep.subr.mxu0 0.0
    %195 = vmatpush1.msra.mxu0 %v177
    %196 = vmatprep.subr.mxu0 0.0
    %197 = vmatpush1.msra.mxu0 %v178
    %198 = vmatprep.subr.mxu0 0.0
    %199 = vmatpush1.msra.mxu0 %v179
    %200 = vmatprep.subr.mxu0 0.0
    %201 = vmatpush1.msra.mxu0 %v180
    %202 = vmatprep.subr.mxu0 0.0
    %203 = vmatpush1.msra.mxu0 0.0
    %204 = vmatprep.subr.mxu0 0.0
    %205 = vmatpush1.msra.mxu0 0.0
    %206 = vmatprep.subr.mxu0 0.0
    %207 = vmatpush1.msra.mxu0 0.0
    %208 = vmatprep.subr.mxu0 0.0
    %209 = vmatpush1.msra.mxu0 0.0
    %210 = vmatprep.subr.mxu0 0.0
    %211 = vmatpush1.msra.mxu0 0.0
    %212 = vmatprep.subr.mxu0 0.0
    %213 = vmatpush1.msra.mxu0 0.0
    %214 = vmatprep.subr.mxu0 0.0
    %215 = vmatpush1.msra.mxu0 0.0
    %216 = vmatprep.subr.mxu0 0.0
    %217 = vmatpush1.msra.mxu0 0.0
    %218 = vmatprep.subr.mxu0 0.0
    %219 = vmatpush1.msra.mxu0 0.0
    %220 = vmatprep.subr.mxu0 0.0
    %221 = vmatpush1.msra.mxu0 0.0
    %222 = vmatprep.subr.mxu0 0.0
    %223 = vmatpush1.msra.mxu0 0.0
    %224 = vmatprep.subr.mxu0 0.0
    %225 = vmatpush1.msra.mxu0 0.0
    %226 = vmatprep.subr.mxu0 0.0
    %227 = vmatpush1.msra.mxu0 0.0
    %228 = vmatprep.subr.mxu0 0.0
    %229 = vmatpush1.msra.mxu0 0.0
    %230 = vmatprep.subr.mxu0 0.0
    %231 = vmatpush1.msra.mxu0 0.0
    %232 = vmatprep.subr.mxu0 0.0
    %233 = vmatpush1.msra.mxu0 0.0
    %234 = vmatprep.subr.mxu0 0.0
    %235 = vmatpush1.msra.mxu0 0.0
    %236 = vmatprep.subr.mxu0 0.0
    %237 = vmatpush1.msra.mxu0 0.0
    %238 = vmatprep.subr.mxu0 0.0
    %239 = vmatpush1.msra.mxu0 0.0
    %240 = vmatprep.subr.mxu0 0.0
    %241 = vmatpush1.msra.mxu0 0.0
    %242 = vmatprep.subr.mxu0 0.0
    %243 = vmatpush1.msra.mxu0 0.0
    %244 = vmatprep.subr.mxu0 0.0
    %245 = vmatpush1.msra.mxu0 0.0
    %246 = vmatprep.subr.mxu0 0.0
    %247 = vmatpush1.msra.mxu0 0.0
    %248 = vmatprep.subr.mxu0 0.0
    %249 = vmatpush1.msra.mxu0 0.0
    %250 = vmatprep.subr.mxu0 0.0
    %251 = vmatpush1.msra.mxu0 0.0
    %252 = vmatprep.subr.mxu0 0.0
    %253 = vmatpush1.msra.mxu0 0.0
    %254 = vmatprep.subr.mxu0 0.0
    %255 = vmatpush1.msra.mxu0 0.0
    %256 = vmatprep.subr.mxu0 0.0
    %257 = vmatpush1.msra.mxu0 0.0
    %258 = vmatprep.mubr.f32.mxu0 0.0
    %259 = vmatmul.mubr.f32.gmra.mrb[0].mxu0 %v189
    %v260 = vpop.f32.mrb[0].mxu0
    %v261 = vadd.f32 %v186, %v260
    %v262 = vpop.f32.mrb[0].mxu0
    %263 = vmatprep.mubr.f32.mxu0 0.0
    %264 = vmatmul.mubr.f32.gmra.mrb[0].mxu0 %v192
    %v265 = vpop.f32.mrb[0].mxu0
    %v266 = vadd.f32 %v186, %v265
    %v267 = vpop.f32.mrb[0].mxu0
    %268 = vdwg.mxu0
    %271 = vrot.lane.b32.xlu0 %v261, 120
    %v272 = vpop.permute.xlu0 %271
    %273 = vrot.lane.b32.xlu0 %v266, 120
    %v274 = vpop.permute.xlu0 %273
    %275 = vrot.lane.b32.xlu0 %v261, 112
    %v276 = vpop.permute.xlu0 %275
    %277 = vrot.lane.b32.xlu0 %v266, 112
    %v278 = vpop.permute.xlu0 %277
    %279 = vrot.lane.b32.xlu0 %v261, 104
    %v280 = vpop.permute.xlu0 %279
    %281 = vrot.lane.b32.xlu0 %v266, 104
    %v282 = vpop.permute.xlu0 %281
    %283 = vrot.lane.b32.xlu0 %v261, 96
    %v284 = vpop.permute.xlu0 %283
    %285 = vrot.lane.b32.xlu0 %v266, 96
    %v286 = vpop.permute.xlu0 %285
    %287 = vrot.lane.b32.xlu0 %v272, 96
    %v288 = vpop.permute.xlu0 %287
    %289 = vrot.lane.b32.xlu0 %v274, 96
    %v290 = vpop.permute.xlu0 %289
    %291 = vrot.lane.b32.xlu0 %v276, 96
    %v292 = vpop.permute.xlu0 %291
    %293 = vrot.lane.b32.xlu0 %v278, 96
    %v294 = vpop.permute.xlu0 %293
    %295 = vrot.lane.b32.xlu0 %v280, 96
    %v296 = vpop.permute.xlu0 %295
    %297 = vrot.lane.b32.xlu0 %v282, 96
    %v298 = vpop.permute.xlu0 %297
    %vm299 = vcmask 64512
    %v300 = vsel %vm299, %v261, 0
    %v302 = vsel %vm299, %v266, 0
    %v304 = vsel %vm299, %v272, 0
    %v306 = vsel %vm299, %v274, 0
    %v308 = vsel %vm299, %v276, 0
    %v310 = vsel %vm299, %v278, 0
    %v312 = vsel %vm299, %v280, 0
    %v314 = vsel %vm299, %v282, 0
    %v316 = vsel %vm299, %v284, 0
    %v318 = vsel %vm299, %v286, 0
    %v320 = vsel %vm299, %v288, 0
    %v322 = vsel %vm299, %v290, 0
    %v324 = vsel %vm299, %v292, 0
    %v326 = vsel %vm299, %v294, 0
    %v328 = vsel %vm299, %v296, 0
    %v330 = vsel %vm299, %v298, 0
    %332 = vmatprep.subr.mxu0 0.0
    %333 = vmatpush1.xpose.msra.mxu0 %v316
    %334 = vmatprep.subr.mxu0 0.0
    %335 = vmatpush1.xpose.msra.mxu0 %v318
    %336 = vmatprep.subr.mxu0 0.0
    %337 = vmatpush1.xpose.msra.mxu0 %v320
    %338 = vmatprep.subr.mxu0 0.0
    %339 = vmatpush1.xpose.msra.mxu0 %v322
    %340 = vmatprep.subr.mxu0 0.0
    %341 = vmatpush1.xpose.msra.mxu0 %v324
    %342 = vmatprep.subr.mxu0 0.0
    %343 = vmatpush1.xpose.msra.mxu0 %v326
    %344 = vmatprep.subr.mxu0 0.0
    %345 = vmatpush1.xpose.msra.mxu0 %v328
    %346 = vmatprep.subr.mxu0 0.0
    %347 = vmatpush1.xpose.msra.mxu0 %v330
    %348 = vmatprep.subr.mxu0 0.0
    %349 = vmatpush1.xpose.msra.mxu0 0.0
    %350 = vmatprep.subr.mxu0 0.0
    %351 = vmatpush1.xpose.msra.mxu0 0.0
    %352 = vmatprep.subr.mxu0 0.0
    %353 = vmatpush1.xpose.msra.mxu0 0.0
    %354 = vmatprep.subr.mxu0 0.0
    %355 = vmatpush1.xpose.msra.mxu0 0.0
    %356 = vmatprep.subr.mxu0 0.0
    %357 = vmatpush1.xpose.msra.mxu0 0.0
    %358 = vmatprep.subr.mxu0 0.0
    %359 = vmatpush1.xpose.msra.mxu0 0.0
    %360 = vmatprep.subr.mxu0 0.0
    %361 = vmatpush1.xpose.msra.mxu0 0.0
    %362 = vmatprep.subr.mxu0 0.0
    %363 = vmatpush1.xpose.msra.mxu0 0.0
    %364 = vmatprep.subr.mxu0 0.0
    %365 = vmatpush1.xpose.msra.mxu0 0.0
    %366 = vmatprep.subr.mxu0 0.0
    %367 = vmatpush1.xpose.msra.mxu0 0.0
    %368 = vmatprep.subr.mxu0 0.0
    %369 = vmatpush1.xpose.msra.mxu0 0.0
    %370 = vmatprep.subr.mxu0 0.0
    %371 = vmatpush1.xpose.msra.mxu0 0.0
    %372 = vmatprep.subr.mxu0 0.0
    %373 = vmatpush1.xpose.msra.mxu0 0.0
    %374 = vmatprep.subr.mxu0 0.0
    %375 = vmatpush1.xpose.msra.mxu0 0.0
    %376 = vmatprep.subr.mxu0 0.0
    %377 = vmatpush1.xpose.msra.mxu0 0.0
    %378 = vmatprep.subr.mxu0 0.0
    %379 = vmatpush1.xpose.msra.mxu0 0.0
    %380 = vmatprep.subr.mxu0 0.0
    %381 = vmatpush1.xpose.msra.mxu0 0.0
    %382 = vmatprep.subr.mxu0 0.0
    %383 = vmatpush1.xpose.msra.mxu0 0.0
    %384 = vmatprep.subr.mxu0 0.0
    %385 = vmatpush1.xpose.msra.mxu0 0.0
    %386 = vmatprep.subr.mxu0 0.0
    %387 = vmatpush1.xpose.msra.mxu0 0.0
    %388 = vmatprep.subr.mxu0 0.0
    %389 = vmatpush1.xpose.msra.mxu0 0.0
    %390 = vmatprep.subr.mxu0 0.0
    %391 = vmatpush1.xpose.msra.mxu0 0.0
    %392 = vmatprep.subr.mxu0 0.0
    %393 = vmatpush1.xpose.msra.mxu0 0.0
    %394 = vmatprep.subr.mxu0 0.0
    %395 = vmatpush1.xpose.msra.mxu0 0.0
    %396 = vmatprep.mubr.f32.mxu0 0.0
    %397 = vmatmul.mubr.f32.gmra.mrb[0].mxu0 %v300
    %v398 = vpop.f32.mrb[0].mxu0
    %v399 = vadd.f32 0.0, %v398
    %v400 = vpop.f32.mrb[0].mxu0
    %401 = vmatprep.mubr.f32.mxu0 0.0
    %402 = vmatmul.mubr.f32.gmra.mrb[0].mxu0 %v302
    %v403 = vpop.f32.mrb[0].mxu0
    %v404 = vadd.f32 0.0, %v403
    %v405 = vpop.f32.mrb[0].mxu0
    %406 = vmatprep.mubr.f32.mxu0 0.0
    %407 = vmatmul.mubr.f32.gmra.mrb[0].mxu0 %v304
    %v408 = vpop.f32.mrb[0].mxu0
    %v409 = vadd.f32 0.0, %v408
    %v410 = vpop.f32.mrb[0].mxu0
    %411 = vmatprep.mubr.f32.mxu0 0.0
    %412 = vmatmul.mubr.f32.gmra.mrb[0].mxu0 %v306
    %v413 = vpop.f32.mrb[0].mxu0
    %v414 = vadd.f32 0.0, %v413
    %v415 = vpop.f32.mrb[0].mxu0
    %416 = vmatprep.mubr.f32.mxu0 0.0
    %417 = vmatmul.mubr.f32.gmra.mrb[0].mxu0 %v308
    %v418 = vpop.f32.mrb[0].mxu0
    %v419 = vadd.f32 0.0, %v418
    %v420 = vpop.f32.mrb[0].mxu0
    %421 = vmatprep.mubr.f32.mxu0 0.0
    %422 = vmatmul.mubr.f32.gmra.mrb[0].mxu0 %v310
    %v423 = vpop.f32.mrb[0].mxu0
    %v424 = vadd.f32 0.0, %v423
    %v425 = vpop.f32.mrb[0].mxu0
    %426 = vmatprep.mubr.f32.mxu0 0.0
    %427 = vmatmul.mubr.f32.gmra.mrb[0].mxu0 %v312
    %v428 = vpop.f32.mrb[0].mxu0
    %v429 = vadd.f32 0.0, %v428
    %v430 = vpop.f32.mrb[0].mxu0
    %431 = vmatprep.mubr.f32.mxu0 0.0
    %432 = vmatmul.mubr.f32.gmra.mrb[0].mxu0 %v314
    %v433 = vpop.f32.mrb[0].mxu0
    %v434 = vadd.f32 0.0, %v433
    %v435 = vpop.f32.mrb[0].mxu0
    %436 = vdwg.mxu0
    %v437 = vmul.f32 %v399, 0.35355338
    %v438 = vmul.f32 %v404, 0.35355338
    %v439 = vmul.f32 %v409, 0.35355338
    %v440 = vmul.f32 %v414, 0.35355338
    %v441 = vmul.f32 %v419, 0.35355338
    %v442 = vmul.f32 %v424, 0.35355338
    %v443 = vmul.f32 %v429, 0.35355338
    %v444 = vmul.f32 %v434, 0.35355338
    %v445 = vadd.f32 %v437, %v118
    %v446 = vadd.f32 %v438, %v119
    %v447 = vadd.f32 %v439, %v120
    %v448 = vadd.f32 %v440, %v121
    %v449 = vadd.f32 %v441, %v122
    %v450 = vadd.f32 %v442, %v123
    %v451 = vadd.f32 %v443, %v124
    %v452 = vadd.f32 %v444, %v125
    %vm453 = vcmask 523264
    %v454 = vsel %vm453, %v445, -inf
    %455 = vmax.xlane.f32.xlu0 %v454
    %v456 = vpop.xlane.xlu0 %455
    %v457 = vsel %vm453, %v446, -inf
    %458 = vmax.xlane.f32.xlu0 %v457
    %v459 = vpop.xlane.xlu0 %458
    %v460 = vsel %vm453, %v447, -inf
    %461 = vmax.xlane.f32.xlu0 %v460
    %v462 = vpop.xlane.xlu0 %461
    %v463 = vsel %vm453, %v448, -inf
    %464 = vmax.xlane.f32.xlu0 %v463
    %v465 = vpop.xlane.xlu0 %464
    %v466 = vsel %vm453, %v449, -inf
    %467 = vmax.xlane.f32.xlu0 %v466
    %v468 = vpop.xlane.xlu0 %467
    %v469 = vsel %vm453, %v450, -inf
    %470 = vmax.xlane.f32.xlu0 %v469
    %v471 = vpop.xlane.xlu0 %470
    %v472 = vsel %vm453, %v451, -inf
    %473 = vmax.xlane.f32.xlu0 %v472
    %v474 = vpop.xlane.xlu0 %473
    %v475 = vsel %vm453, %v452, -inf
    %476 = vmax.xlane.f32.xlu0 %v475
    %v477 = vpop.xlane.xlu0 %476
    %v478 = vsub.f32 %v445, %v456
    %v479 = vsub.f32 %v446, %v459
    %v480 = vsub.f32 %v447, %v462
    %v481 = vsub.f32 %v448, %v465
    %v482 = vsub.f32 %v449, %v468
    %v483 = vsub.f32 %v450, %v471
    %v484 = vsub.f32 %v451, %v474
    %v485 = vsub.f32 %v452, %v477
    %v486 = vmul.f32 %v478, 1.442695
    %v487 = vpow.pop %v486
    %v488 = vmul.f32 %v479, 1.442695
    %v489 = vpow.pop %v488
    %v490 = vmul.f32 %v480, 1.442695
    %v491 = vpow.pop %v490
    %v492 = vmul.f32 %v481, 1.442695
    %v493 = vpow.pop %v492
    %v494 = vmul.f32 %v482, 1.442695
    %v495 = vpow.pop %v494
    %v496 = vmul.f32 %v483, 1.442695
    %v497 = vpow.pop %v496
    %v498 = vmul.f32 %v484, 1.442695
    %v499 = vpow.pop %v498
    %v500 = vmul.f32 %v485, 1.442695
    %v501 = vpow.pop %v500
    %v502 = vsel %vm453, %v487, 0.0
    %503 = vadd.xlane.f32.xlu0 %v502
    %v504 = vpop.xlane.xlu0 %503
    %v505 = vsel %vm453, %v489, 0.0
    %506 = vadd.xlane.f32.xlu0 %v505
    %v507 = vpop.xlane.xlu0 %506
    %v508 = vsel %vm453, %v491, 0.0
    %509 = vadd.xlane.f32.xlu0 %v508
    %v510 = vpop.xlane.xlu0 %509
    %v511 = vsel %vm453, %v493, 0.0
    %512 = vadd.xlane.f32.xlu0 %v511
    %v513 = vpop.xlane.xlu0 %512
    %v514 = vsel %vm453, %v495, 0.0
    %515 = vadd.xlane.f32.xlu0 %v514
    %v516 = vpop.xlane.xlu0 %515
    %v517 = vsel %vm453, %v497, 0.0
    %518 = vadd.xlane.f32.xlu0 %v517
    %v519 = vpop.xlane.xlu0 %518
    %v520 = vsel %vm453, %v499, 0.0
    %521 = vadd.xlane.f32.xlu0 %v520
    %v522 = vpop.xlane.xlu0 %521
    %v523 = vsel %vm453, %v501, 0.0
    %524 = vadd.xlane.f32.xlu0 %v523
    %v525 = vpop.xlane.xlu0 %524
    %v526 = vrcp.pop %v504
    %v527 = vrcp.pop %v507
    %v528 = vrcp.pop %v510
    %v529 = vrcp.pop %v513
    %v530 = vrcp.pop %v516
    %v531 = vrcp.pop %v519
    %v532 = vrcp.pop %v522
    %v533 = vrcp.pop %v525
    %v534 = vmul.f32 %v487, %v526
    %v535 = vmul.f32 %v489, %v527
    %v536 = vmul.f32 %v491, %v528
    %v537 = vmul.f32 %v493, %v529
    %v538 = vmul.f32 %v495, %v530
    %v539 = vmul.f32 %v497, %v531
    %v540 = vmul.f32 %v499, %v532
    %v541 = vmul.f32 %v501, %v533
    %542 = vrot.lane.b32.xlu0 %v261, 64
    %v543 = vpop.permute.xlu0 %542
    %544 = vrot.lane.b32.xlu0 %v266, 64
    %v545 = vpop.permute.xlu0 %544
    %546 = vrot.lane.b32.xlu0 %v272, 64
    %v547 = vpop.permute.xlu0 %546
    %548 = vrot.lane.b32.xlu0 %v274, 64
    %v549 = vpop.permute.xlu0 %548
    %550 = vrot.lane.b32.xlu0 %v276, 64
    %v551 = vpop.permute.xlu0 %550
    %552 = vrot.lane.b32.xlu0 %v278, 64
    %v553 = vpop.permute.xlu0 %552
    %554 = vrot.lane.b32.xlu0 %v280, 64
    %v555 = vpop.permute.xlu0 %554
    %556 = vrot.lane.b32.xlu0 %v282, 64
    %v557 = vpop.permute.xlu0 %556
    %v567 = vsel %vm453, %v534, 0
    %v570 = vsel %vm453, %v535, 0
    %v573 = vsel %vm453, %v536, 0
    %v576 = vsel %vm453, %v537, 0
    %v579 = vsel %vm453, %v538, 0
    %v582 = vsel %vm453, %v539, 0
    %v585 = vsel %vm453, %v540, 0
    %v588 = vsel %vm453, %v541, 0
    %590 = vmatprep.subr.mxu0 0.0
    %591 = vmatpush1.msra.mxu0 %v543
    %592 = vmatprep.subr.mxu0 0.0
    %593 = vmatpush1.msra.mxu0 %v545
    %594 = vmatprep.subr.mxu0 0.0
    %595 = vmatpush1.msra.mxu0 %v547
    %596 = vmatprep.subr.mxu0 0.0
    %597 = vmatpush1.msra.mxu0 %v549
    %598 = vmatprep.subr.mxu0 0.0
    %599 = vmatpush1.msra.mxu0 %v551
    %600 = vmatprep.subr.mxu0 0.0
    %601 = vmatpush1.msra.mxu0 %v553
    %602 = vmatprep.subr.mxu0 0.0
    %603 = vmatpush1.msra.mxu0 %v555
    %604 = vmatprep.subr.mxu0 0.0
    %605 = vmatpush1.msra.mxu0 %v557
    %606 = vmatprep.subr.mxu0 0.0
    %607 = vmatpush1.msra.mxu0 0.0
    %608 = vmatprep.subr.mxu0 0.0
    %609 = vmatpush1.msra.mxu0 0.0
    %610 = vmatprep.subr.mxu0 0.0
    %611 = vmatpush1.msra.mxu0 0.0
    %612 = vmatprep.subr.mxu0 0.0
    %613 = vmatpush1.msra.mxu0 0.0
    %614 = vmatprep.subr.mxu0 0.0
    %615 = vmatpush1.msra.mxu0 0.0
    %616 = vmatprep.subr.mxu0 0.0
    %617 = vmatpush1.msra.mxu0 0.0
    %618 = vmatprep.subr.mxu0 0.0
    %619 = vmatpush1.msra.mxu0 0.0
    %620 = vmatprep.subr.mxu0 0.0
    %621 = vmatpush1.msra.mxu0 0.0
    %622 = vmatprep.subr.mxu0 0.0
    %623 = vmatpush1.msra.mxu0 0.0
    %624 = vmatprep.subr.mxu0 0.0
    %625 = vmatpush1.msra.mxu0 0.0
    %626 = vmatprep.subr.mxu0 0.0
    %627 = vmatpush1.msra.mxu0 0.0
    %628 = vmatprep.subr.mxu0 0.0
    %629 = vmatpush1.msra.mxu0 0.0
    %630 = vmatprep.subr.mxu0 0.0
    %631 = vmatpush1.msra.mxu0 0.0
    %632 = vmatprep.subr.mxu0 0.0
    %633 = vmatpush1.msra.mxu0 0.0
    %634 = vmatprep.subr.mxu0 0.0
    %635 = vmatpush1.msra.mxu0 0.0
    %636 = vmatprep.subr.mxu0 0.0
    %637 = vmatpush1.msra.mxu0 0.0
    %638 = vmatprep.subr.mxu0 0.0
    %639 = vmatpush1.msra.mxu0 0.0
    %640 = vmatprep.subr.mxu0 0.0
    %641 = vmatpush1.msra.mxu0 0.0
    %642 = vmatprep.subr.mxu0 0.0
    %643 = vmatpush1.msra.mxu0 0.0
    %644 = vmatprep.subr.mxu0 0.0
    %645 = vmatpush1.msra.mxu0 0.0
    %646 = vmatprep.subr.mxu0 0.0
    %647 = vmatpush1.msra.mxu0 0.0
    %648 = vmatprep.subr.mxu0 0.0
    %649 = vmatpush1.msra.mxu0 0.0
    %650 = vmatprep.subr.mxu0 0.0
    %651 = vmatpush1.msra.mxu0 0.0
    %652 = vmatprep.subr.mxu0 0.0
    %653 = vmatpush1.msra.mxu0 0.0
    %654 = vmatprep.mubr.f32.mxu0 0.0
    %655 = vmatmul.mubr.f32.gmra.mrb[0].mxu0 %v567
    %v656 = vpop.f32.mrb[0].mxu0
    %v657 = vadd.f32 0.0, %v656
    %v658 = vpop.f32.mrb[0].mxu0
    %659 = vmatprep.mubr.f32.mxu0 0.0
    %660 = vmatmul.mubr.f32.gmra.mrb[0].mxu0 %v570
    %v661 = vpop.f32.mrb[0].mxu0
    %v662 = vadd.f32 0.0, %v661
    %v663 = vpop.f32.mrb[0].mxu0
    %664 = vmatprep.mubr.f32.mxu0 0.0
    %665 = vmatmul.mubr.f32.gmra.mrb[0].mxu0 %v573
    %v666 = vpop.f32.mrb[0].mxu0
    %v667 = vadd.f32 0.0, %v666
    %v668 = vpop.f32.mrb[0].mxu0
    %669 = vmatprep.mubr.f32.mxu0 0.0
    %670 = vmatmul.mubr.f32.gmra.mrb[0].mxu0 %v576
    %v671 = vpop.f32.mrb[0].mxu0
    %v672 = vadd.f32 0.0, %v671
    %v673 = vpop.f32.mrb[0].mxu0
    %674 = vmatprep.mubr.f32.mxu0 0.0
    %675 = vmatmul.mubr.f32.gmra.mrb[0].mxu0 %v579
    %v676 = vpop.f32.mrb[0].mxu0
    %v677 = vadd.f32 0.0, %v676
    %v678 = vpop.f32.mrb[0].mxu0
    %679 = vmatprep.mubr.f32.mxu0 0.0
    %680 = vmatmul.mubr.f32.gmra.mrb[0].mxu0 %v582
    %v681 = vpop.f32.mrb[0].mxu0
    %v682 = vadd.f32 0.0, %v681
    %v683 = vpop.f32.mrb[0].mxu0
    %684 = vmatprep.mubr.f32.mxu0 0.0
    %685 = vmatmul.mubr.f32.gmra.mrb[0].mxu0 %v585
    %v686 = vpop.f32.mrb[0].mxu0
    %v687 = vadd.f32 0.0, %v686
    %v688 = vpop.f32.mrb[0].mxu0
    %689 = vmatprep.mubr.f32.mxu0 0.0
    %690 = vmatmul.mubr.f32.gmra.mrb[0].mxu0 %v588
    %v691 = vpop.f32.mrb[0].mxu0
    %v692 = vadd.f32 0.0, %v691
    %v693 = vpop.f32.mrb[0].mxu0
    %694 = vdwg.mxu0
    %697 = vrot.lane.b32.xlu0 %v667, 8
    %v698 = vpop.permute.xlu0 %697
    %699 = vrot.lane.b32.xlu0 %v672, 8
    %v700 = vpop.permute.xlu0 %699
    %705 = vrot.lane.b32.xlu0 %v677, 16
    %v706 = vpop.permute.xlu0 %705
    %707 = vrot.lane.b32.xlu0 %v682, 16
    %v708 = vpop.permute.xlu0 %707
    %713 = vrot.lane.b32.xlu0 %v687, 24
    %v714 = vpop.permute.xlu0 %713
    %715 = vrot.lane.b32.xlu0 %v692, 24
    %v716 = vpop.permute.xlu0 %715
    %v719 = vsel %vm299, %v657, %v698
    %v720 = vsel %vm299, %v662, %v700
    %vm721 = vcmask 130048
    %v722 = vsel %vm721, %v719, %v706
    %v723 = vsel %vm721, %v720, %v708
    %vm724 = vcmask 195584
    %v725 = vsel %vm724, %v722, %v714
    %v726 = vsel %vm724, %v723, %v716
    %v727 = vld [vmem:[#allocation7] sm:$0xff]
    %v728 = vld [vmem:[#allocation7 + $0x8] sm:$0xff]
    %v729 = vld [vmem:[#allocation7 + $0x10] sm:$0xff]
    %v730 = vld [vmem:[#allocation7 + $0x18] sm:$0xff]
    %v731 = vld [vmem:[#allocation9] sm:$0x1]
    %v733 = vlaneseq
    %v734 = vshrl.u32 %v733, 7
    %v735 = vsub.s32 0, %v734
    %v736 = vrot.slane %v731, %v735
    %v739 = vsel %vm128, %v725, 0
    %v742 = vsel %vm128, %v726, 0
    %744 = vmatprep.subr.mxu0 0.0
    %745 = vmatpush1.msra.mxu0 %v727
    %746 = vmatprep.subr.mxu0 0.0
    %747 = vmatpush1.msra.mxu0 %v728
    %748 = vmatprep.subr.mxu0 0.0
    %749 = vmatpush1.msra.mxu0 %v729
    %750 = vmatprep.subr.mxu0 0.0
    %751 = vmatpush1.msra.mxu0 %v730
    %752 = vmatprep.subr.mxu0 0.0
    %753 = vmatpush1.msra.mxu0 0.0
    %754 = vmatprep.subr.mxu0 0.0
    %755 = vmatpush1.msra.mxu0 0.0
    %756 = vmatprep.subr.mxu0 0.0
    %757 = vmatpush1.msra.mxu0 0.0
    %758 = vmatprep.subr.mxu0 0.0
    %759 = vmatpush1.msra.mxu0 0.0
    %760 = vmatprep.subr.mxu0 0.0
    %761 = vmatpush1.msra.mxu0 0.0
    %762 = vmatprep.subr.mxu0 0.0
    %763 = vmatpush1.msra.mxu0 0.0
    %764 = vmatprep.subr.mxu0 0.0
    %765 = vmatpush1.msra.mxu0 0.0
    %766 = vmatprep.subr.mxu0 0.0
    %767 = vmatpush1.msra.mxu0 0.0
    %768 = vmatprep.subr.mxu0 0.0
    %769 = vmatpush1.msra.mxu0 0.0
    %770 = vmatprep.subr.mxu0 0.0
    %771 = vmatpush1.msra.mxu0 0.0
    %772 = vmatprep.subr.mxu0 0.0
    %773 = vmatpush1.msra.mxu0 0.0
    %774 = vmatprep.subr.mxu0 0.0
    %775 = vmatpush1.msra.mxu0 0.0
    %776 = vmatprep.subr.mxu0 0.0
    %777 = vmatpush1.msra.mxu0 0.0
    %778 = vmatprep.subr.mxu0 0.0
    %779 = vmatpush1.msra.mxu0 0.0
    %780 = vmatprep.subr.mxu0 0.0
    %781 = vmatpush1.msra.mxu0 0.0
    %782 = vmatprep.subr.mxu0 0.0
    %783 = vmatpush1.msra.mxu0 0.0
    %784 = vmatprep.subr.mxu0 0.0
    %785 = vmatpush1.msra.mxu0 0.0
    %786 = vmatprep.subr.mxu0 0.0
    %787 = vmatpush1.msra.mxu0 0.0
    %788 = vmatprep.subr.mxu0 0.0
    %789 = vmatpush1.msra.mxu0 0.0
    %790 = vmatprep.subr.mxu0 0.0
    %791 = vmatpush1.msra.mxu0 0.0
    %792 = vmatprep.subr.mxu0 0.0
    %793 = vmatpush1.msra.mxu0 0.0
    %794 = vmatprep.subr.mxu0 0.0
    %795 = vmatpush1.msra.mxu0 0.0
    %796 = vmatprep.subr.mxu0 0.0
    %797 = vmatpush1.msra.mxu0 0.0
    %798 = vmatprep.subr.mxu0 0.0
    %799 = vmatpush1.msra.mxu0 0.0
    %800 = vmatprep.subr.mxu0 0.0
    %801 = vmatpush1.msra.mxu0 0.0
    %802 = vmatprep.subr.mxu0 0.0
    %803 = vmatpush1.msra.mxu0 0.0
    %804 = vmatprep.subr.mxu0 0.0
    %805 = vmatpush1.msra.mxu0 0.0
    %806 = vmatprep.subr.mxu0 0.0
    %807 = vmatpush1.msra.mxu0 0.0
    %808 = vmatprep.mubr.f32.mxu0 0.0
    %809 = vmatmul.mubr.f32.gmra.mrb[0].mxu0 %v739
    %v810 = vpop.f32.mrb[0].mxu0
    %v811 = vadd.f32 %v736, %v810
    %v812 = vpop.f32.mrb[0].mxu0
    %813 = vmatprep.mubr.f32.mxu0 0.0
    %814 = vmatmul.mubr.f32.gmra.mrb[0].mxu0 %v742
    %v815 = vpop.f32.mrb[0].mxu0
    %v816 = vadd.f32 %v736, %v815
    %v817 = vpop.f32.mrb[0].mxu0
    %818 = vdwg.mxu0
    %v819 = vadd.f32 %v116, %v811
    %v820 = vadd.f32 %v117, %v816
    %s821 = sld [smem:[#allocation2 + $0x2]]
    %s822 = sld [smem:[#allocation2 + $0x3]]
    %v823 = vsel %vm128, %v819, 0.0
    %824 = vadd.xlane.f32.xlu0 %v823
    %v825 = vpop.xlane.xlu0 %824
    %v826 = vsel %vm128, %v820, 0.0
    %827 = vadd.xlane.f32.xlu0 %v826
    %v828 = vpop.xlane.xlu0 %827
    %v829 = vmul.f32 %v825, %v135
    %v830 = vmul.f32 %v828, %v135
    %v831 = vsub.f32 %v819, %v829
    %v832 = vsub.f32 %v820, %v830
    %v833 = vmul.f32 %v831, %v831
    %v834 = vmul.f32 %v832, %v832
    %v835 = vsel %vm128, %v833, 0.0
    %836 = vadd.xlane.f32.xlu0 %v835
    %v837 = vpop.xlane.xlu0 %836
    %v838 = vsel %vm128, %v834, 0.0
    %839 = vadd.xlane.f32.xlu0 %v838
    %v840 = vpop.xlane.xlu0 %839
    %v841 = vmul.f32 %v837, %v148
    %v842 = vmul.f32 %v840, %v148
    %v843 = vrsqrt.pop %v841
    %v844 = vmul.f32 %v841, %v843
    %vm845 = vcmp.eq.f32.partialorder %v841, inf
    %v846 = vsel %vm845, %v841, %v844
    %vm847 = vcmp.eq.f32.partialorder %v841, 0.0
    %v848 = vand.u32 %v841, 2147483648
    %v849 = vsel %vm847, %v848, %v846
    %v850 = vrsqrt.pop %v842
    %v851 = vmul.f32 %v842, %v850
    %vm852 = vcmp.eq.f32.partialorder %v842, inf
    %v853 = vsel %vm852, %v842, %v851
    %vm854 = vcmp.eq.f32.partialorder %v842, 0.0
    %v855 = vand.u32 %v842, 2147483648
    %v856 = vsel %vm854, %v855, %v853
    %v857 = vstv %s821
    %v858 = vmul.f32 %v857, %v831
    %v859 = vmul.f32 %v857, %v832
    %v860 = vadd.f32 %v849, 1e-05
    %v861 = vadd.f32 %v856, 1e-05
    %v862 = vrcp.pop %v860
    %v863 = vmul.f32 %v858, %v862
    %v864 = vrcp.pop %v861
    %v865 = vmul.f32 %v859, %v864
    %v866 = vstv %s822
    %v867 = vadd.f32 %v863, %v866
    %v868 = vadd.f32 %v865, %v866
    %v869 = vld [vmem:[#allocation10] sm:$0xff]
    %v870 = vld [vmem:[#allocation10 + $0x8] sm:$0xff]
    %v871 = vld [vmem:[#allocation10 + $0x10] sm:$0xff]
    %v872 = vld [vmem:[#allocation10 + $0x18] sm:$0xff]
    %v873 = vld [vmem:[#allocation12] sm:$0x1]
    %v875 = vlaneseq
    %v876 = vshrl.u32 %v875, 7
    %v877 = vsub.s32 0, %v876
    %v878 = vrot.slane %v873, %v877
    %v881 = vsel %vm128, %v867, 0
    %v884 = vsel %vm128, %v868, 0
    %886 = vmatprep.subr.mxu0 0.0
    %887 = vmatpush1.msra.mxu0 %v869
    %888 = vmatprep.subr.mxu0 0.0
    %889 = vmatpush1.msra.mxu0 %v870
    %890 = vmatprep.subr.mxu0 0.0
    %891 = vmatpush1.msra.mxu0 %v871
    %892 = vmatprep.subr.mxu0 0.0
    %893 = vmatpush1.msra.mxu0 %v872
    %894 = vmatprep.subr.mxu0 0.0
    %895 = vmatpush1.msra.mxu0 0.0
    %896 = vmatprep.subr.mxu0 0.0
    %897 = vmatpush1.msra.mxu0 0.0
    %898 = vmatprep.subr.mxu0 0.0
    %899 = vmatpush1.msra.mxu0 0.0
    %900 = vmatprep.subr.mxu0 0.0
    %901 = vmatpush1.msra.mxu0 0.0
    %902 = vmatprep.subr.mxu0 0.0
    %903 = vmatpush1.msra.mxu0 0.0
    %904 = vmatprep.subr.mxu0 0.0
    %905 = vmatpush1.msra.mxu0 0.0
    %906 = vmatprep.subr.mxu0 0.0
    %907 = vmatpush1.msra.mxu0 0.0
    %908 = vmatprep.subr.mxu0 0.0
    %909 = vmatpush1.msra.mxu0 0.0
    %910 = vmatprep.subr.mxu0 0.0
    %911 = vmatpush1.msra.mxu0 0.0
    %912 = vmatprep.subr.mxu0 0.0
    %913 = vmatpush1.msra.mxu0 0.0
    %914 = vmatprep.subr.mxu0 0.0
    %915 = vmatpush1.msra.mxu0 0.0
    %916 = vmatprep.subr.mxu0 0.0
    %917 = vmatpush1.msra.mxu0 0.0
    %918 = vmatprep.subr.mxu0 0.0
    %919 = vmatpush1.msra.mxu0 0.0
    %920 = vmatprep.subr.mxu0 0.0
    %921 = vmatpush1.msra.mxu0 0.0
    %922 = vmatprep.subr.mxu0 0.0
    %923 = vmatpush1.msra.mxu0 0.0
    %924 = vmatprep.subr.mxu0 0.0
    %925 = vmatpush1.msra.mxu0 0.0
    %926 = vmatprep.subr.mxu0 0.0
    %927 = vmatpush1.msra.mxu0 0.0
    %928 = vmatprep.subr.mxu0 0.0
    %929 = vmatpush1.msra.mxu0 0.0
    %930 = vmatprep.subr.mxu0 0.0
    %931 = vmatpush1.msra.mxu0 0.0
    %932 = vmatprep.subr.mxu0 0.0
    %933 = vmatpush1.msra.mxu0 0.0
    %934 = vmatprep.subr.mxu0 0.0
    %935 = vmatpush1.msra.mxu0 0.0
    %936 = vmatprep.subr.mxu0 0.0
    %937 = vmatpush1.msra.mxu0 0.0
    %938 = vmatprep.subr.mxu0 0.0
    %939 = vmatpush1.msra.mxu0 0.0
    %940 = vmatprep.subr.mxu0 0.0
    %941 = vmatpush1.msra.mxu0 0.0
    %942 = vmatprep.subr.mxu0 0.0
    %943 = vmatpush1.msra.mxu0 0.0
    %944 = vmatprep.subr.mxu0 0.0
    %945 = vmatpush1.msra.mxu0 0.0
    %946 = vmatprep.subr.mxu0 0.0
    %947 = vmatpush1.msra.mxu0 0.0
    %948 = vmatprep.subr.mxu0 0.0
    %949 = vmatpush1.msra.mxu0 0.0
    %950 = vmatprep.mubr.f32.mxu0 0.0
    %951 = vmatmul.mubr.f32.gmra.mrb[0].mxu0 %v881
    %v952 = vpop.f32.mrb[0].mxu0
    %v953 = vadd.f32 %v878, %v952
    %v954 = vpop.f32.mrb[0].mxu0
    %955 = vmatprep.mubr.f32.mxu0 0.0
    %956 = vmatmul.mubr.f32.gmra.mrb[0].mxu0 %v884
    %v957 = vpop.f32.mrb[0].mxu0
    %v958 = vadd.f32 %v878, %v957
    %v959 = vpop.f32.mrb[0].mxu0
    %960 = vdwg.mxu0
    %v961 = vmax.f32 %v953, 0.0
    %v962 = vmax.f32 %v958, 0.0
    %v963 = vld [vmem:[%s9] sm:$0xff]
    %v964 = vld [vmem:[%s9 + $0x8] sm:$0xff]
    %v965 = vld [vmem:[%s9 + $0x10] sm:$0xff]
    %v966 = vld [vmem:[%s9 + $0x18] sm:$0xff]
    %v967 = vld [vmem:[%s9 + $0x20] sm:$0xff]
    %v968 = vld [vmem:[%s9 + $0x28] sm:$0xff]
    %v969 = vld [vmem:[%s9 + $0x30] sm:$0xff]
    %v970 = vld [vmem:[%s9 + $0x38] sm:$0xff]
    %v971 = vld [vmem:[%s10] sm:$0x1]
    %v973 = vlaneseq
    %v974 = vshrl.u32 %v973, 7
    %v975 = vsub.s32 0, %v974
    %v976 = vrot.slane %v971, %v975
    %v979 = vsel %vm453, %v961, 0
    %v982 = vsel %vm453, %v962, 0
    %984 = vmatprep.subr.mxu0 0.0
    %985 = vmatpush1.msra.mxu0 %v963
    %986 = vmatprep.subr.mxu0 0.0
    %987 = vmatpush1.msra.mxu0 %v964
    %988 = vmatprep.subr.mxu0 0.0
    %989 = vmatpush1.msra.mxu0 %v965
    %990 = vmatprep.subr.mxu0 0.0
    %991 = vmatpush1.msra.mxu0 %v966
    %992 = vmatprep.subr.mxu0 0.0
    %993 = vmatpush1.msra.mxu0 %v967
    %994 = vmatprep.subr.mxu0 0.0
    %995 = vmatpush1.msra.mxu0 %v968
    %996 = vmatprep.subr.mxu0 0.0
    %997 = vmatpush1.msra.mxu0 %v969
    %998 = vmatprep.subr.mxu0 0.0
    %999 = vmatpush1.msra.mxu0 %v970
    %1000 = vmatprep.subr.mxu0 0.0
    %1001 = vmatpush1.msra.mxu0 0.0
    %1002 = vmatprep.subr.mxu0 0.0
    %1003 = vmatpush1.msra.mxu0 0.0
    %1004 = vmatprep.subr.mxu0 0.0
    %1005 = vmatpush1.msra.mxu0 0.0
    %1006 = vmatprep.subr.mxu0 0.0
    %1007 = vmatpush1.msra.mxu0 0.0
    %1008 = vmatprep.subr.mxu0 0.0
    %1009 = vmatpush1.msra.mxu0 0.0
    %1010 = vmatprep.subr.mxu0 0.0
    %1011 = vmatpush1.msra.mxu0 0.0
    %1012 = vmatprep.subr.mxu0 0.0
    %1013 = vmatpush1.msra.mxu0 0.0
    %1014 = vmatprep.subr.mxu0 0.0
    %1015 = vmatpush1.msra.mxu0 0.0
    %1016 = vmatprep.subr.mxu0 0.0
    %1017 = vmatpush1.msra.mxu0 0.0
    %1018 = vmatprep.subr.mxu0 0.0
    %1019 = vmatpush1.msra.mxu0 0.0
    %1020 = vmatprep.subr.mxu0 0.0
    %1021 = vmatpush1.msra.mxu0 0.0
    %1022 = vmatprep.subr.mxu0 0.0
    %1023 = vmatpush1.msra.mxu0 0.0
    %1024 = vmatprep.subr.mxu0 0.0
    %1025 = vmatpush1.msra.mxu0 0.0
    %1026 = vmatprep.subr.mxu0 0.0
    %1027 = vmatpush1.msra.mxu0 0.0
    %1028 = vmatprep.subr.mxu0 0.0
    %1029 = vmatpush1.msra.mxu0 0.0
    %1030 = vmatprep.subr.mxu0 0.0
    %1031 = vmatpush1.msra.mxu0 0.0
    %1032 = vmatprep.subr.mxu0 0.0
    %1033 = vmatpush1.msra.mxu0 0.0
    %1034 = vmatprep.subr.mxu0 0.0
    %1035 = vmatpush1.msra.mxu0 0.0
    %1036 = vmatprep.subr.mxu0 0.0
    %1037 = vmatpush1.msra.mxu0 0.0
    %1038 = vmatprep.subr.mxu0 0.0
    %1039 = vmatpush1.msra.mxu0 0.0
    %1040 = vmatprep.subr.mxu0 0.0
    %1041 = vmatpush1.msra.mxu0 0.0
    %1042 = vmatprep.subr.mxu0 0.0
    %1043 = vmatpush1.msra.mxu0 0.0
    %1044 = vmatprep.subr.mxu0 0.0
    %1045 = vmatpush1.msra.mxu0 0.0
    %1046 = vmatprep.subr.mxu0 0.0
    %1047 = vmatpush1.msra.mxu0 0.0
    %1048 = vmatprep.mubr.f32.mxu0 0.0
    %1049 = vmatmul.mubr.f32.gmra.mrb[0].mxu0 %v979
    %v1050 = vpop.f32.mrb[0].mxu0
    %v1051 = vadd.f32 %v976, %v1050
    %v1052 = vpop.f32.mrb[0].mxu0
    %1053 = vmatprep.mubr.f32.mxu0 0.0
    %1054 = vmatmul.mubr.f32.gmra.mrb[0].mxu0 %v982
    %v1055 = vpop.f32.mrb[0].mxu0
    %v1056 = vadd.f32 %v976, %v1055
    %v1057 = vpop.f32.mrb[0].mxu0
    %1058 = vdwg.mxu0
    %v1059 = vadd.f32 %v819, %v1051
    %v1060 = vadd.f32 %v820, %v1056
    %1061 = vst.msk [vmem:[#allocation13] sm:$0xff] %vm128, %v1059
    %1062 = vst.msk [vmem:[#allocation13 + $0x8] sm:$0xff] %vm128, %v1060
    // Predicated region
    $region70: #{tpu_custom_call.1} parent=1 // pred_check
      _
    $region71: #{tpu_custom_call.1} parent=1 // pred_check_branch
      %1064 = sbr.rel (0) target = $region73
    $region72: #{tpu_custom_call.1} parent=1 // pred_region
      %s1066 = ssub.s32 256, 256
      %1067 = vsyncadd [#allocation4], %s1066
      %s1068 = sshll.u32 [#allocation13], 4
      %s1069 = int_to_ptr.vmem [resolvable:$true] %s1068
      %1074 = dma.vmem_to_hbm [thread:$0]  %s1069, 256, %s11, [#allocation4], 128, 128, 8
    $region73: #{tpu_custom_call.1} parent=1 // pred_fallthru
      _
    // Predicated region
    $region74: #{tpu_custom_call.1} parent=1 // pred_check
      _
    $region75: #{tpu_custom_call.1} parent=1 // pred_check_branch
      %1076 = sbr.rel (0) target = $region77
    $region76: #{tpu_custom_call.1} parent=1 // pred_region
      %1077 = dma.done [#allocation4], 256
    $region77: #{tpu_custom_call.1} parent=1 // pred_fallthru
      _
    %1078 = vsyncpa [#allocation3], 1
    %1079 = vsyncpa [#allocation8], 1
    %1080 = vsyncpa [#allocation11], 1
    %1081 = vsyncpa [#allocation4], 1
    %1082 = vsyncpa [#allocation5], 1

</llo_original>
